<compile_context>
chip_gen: v7x
topology: tpu7x:2x2x1
jax: 0.10.0
libtpu: 0.0.40
codegen_flags: <defaults>
</compile_context>

<pallas_src>
import functools

import jax
import jax.numpy as jnp
from jax import lax
from jax.experimental import pallas as pl
from jax.experimental.pallas import tpu as pltpu


def _keep_mask(seed_u32, row0, col0, shape, hidden, drop_prob):
    """Stateless counter-based PRNG keep-mask (integer-domain threshold)."""
    rows = row0 + lax.broadcasted_iota(jnp.int32, shape, 0)
    cols = col0 + lax.broadcasted_iota(jnp.int32, shape, 1)
    idx = (rows * hidden + cols).astype(jnp.uint32)
    # murmur3 fmix32 over (global element index, seed)
    h = idx + seed_u32 * jnp.uint32(0x9E3779B9)
    h = h ^ (h >> 16)
    h = h * jnp.uint32(0x85EBCA6B)
    h = h ^ (h >> 13)
    h = h * jnp.uint32(0xC2B2AE35)
    h = h ^ (h >> 16)
    # keep iff top-31 random bits >= threshold  (P(keep) = 1 - drop_prob)
    h31 = (h >> 1).astype(jnp.int32)
    thresh = jnp.int32(min(int(drop_prob * (1 << 31)), (1 << 31) - 1))
    return h31 >= thresh


def _output_layer_kernel(seed_ref, x_ref, w_ref, b_ref, g_ref, beta_ref, o_ref,
                         *, hidden, tm, tn, drop_prob, training, eps):
    # ---- LayerNorm over the hidden axis (f32, VPU) ----
    x = x_ref[...].astype(jnp.float32)                         # (tm, H)
    mean = jnp.mean(x, axis=-1, keepdims=True)
    xc = x - mean
    var = jnp.mean(xc * xc, axis=-1, keepdims=True)
    xhat = xc * lax.rsqrt(var + eps)
    xn = xhat * g_ref[...].astype(jnp.float32) + beta_ref[...].astype(jnp.float32)

    # ---- Linear: bf16 operands on the MXU, f32 accumulation ----
    # w_ref tile is (tn, H) in PyTorch (out, in) layout; contract the hidden
    # axes directly (== xn @ w_tile.T), so no host-side transposed weight copy.
    y = lax.dot_general(
        xn.astype(jnp.bfloat16), w_ref[...],
        dimension_numbers=(((1,), (1,)), ((), ())),
        preferred_element_type=jnp.float32)                    # (tm, tn)
    y = y + b_ref[...].astype(jnp.float32)                     # (1, tn) bcast

    # ---- Inverted dropout (training only), integer-domain compare ----
    if training and drop_prob > 0.0:
        row0 = pl.program_id(0) * tm
        col0 = pl.program_id(1) * tn
        keep = _keep_mask(seed_ref[0].astype(jnp.uint32), row0, col0,
                          (tm, tn), hidden, drop_prob)
        y = jnp.where(keep, y * jnp.float32(1.0 / (1.0 - drop_prob)), 0.0)

    o_ref[...] = y.astype(o_ref.dtype)


def _pick_tn(hidden):
    # Column tile: lane-dense (>=128) multiple of 128 that divides hidden and
    # keeps the bf16 weight tile small enough for v7x's 64 MiB VMEM; if the
    # hidden size is small / unaligned, use a single full-width column tile.
    if hidden % 128 != 0:
        return hidden
    for cand in (512, 256, 128):
        if hidden % cand == 0:
            return cand
    return hidden


def output_layer(x, w, b, gamma, beta, *, drop_prob=0.1, training=False,
                 seed=0, eps=1e-5, tm=None, tn=None):
    """x: (batch, seq, hidden).  w: (hidden, hidden) PyTorch Linear weight
    in (out, in) layout.  Returns (batch, seq, hidden) in x.dtype."""
    batch, seq, hidden = x.shape
    m = batch * seq
    x2 = x.reshape(m, hidden)

    if tm is None:
        tm = min(m, 256)
    if tn is None:
        tn = _pick_tn(hidden)
    assert hidden % tn == 0, "tn must divide hidden"

    grid_m = pl.cdiv(m, tm)
    grid_n = hidden // tn
    m_pad = grid_m * tm
    if m_pad != m:
        # Only the remainder rows of the last tile are padded; padded rows give
        # var=0 -> rsqrt(eps) (finite) and are sliced off after the call.
        x2 = jnp.pad(x2, ((0, m_pad - m), (0, 0)))

    w_bf16 = w.astype(jnp.bfloat16)        # MXU-native; halves weight HBM/VMEM bytes
    b2 = b.reshape(1, hidden).astype(jnp.float32)
    g2 = gamma.reshape(1, hidden).astype(jnp.float32)
    beta2 = beta.reshape(1, hidden).astype(jnp.float32)
    seed_arr = jnp.asarray([seed], dtype=jnp.int32)

    kernel = functools.partial(
        _output_layer_kernel, hidden=hidden, tm=tm, tn=tn,
        drop_prob=float(drop_prob), training=bool(training), eps=float(eps))

    out = pl.pallas_call(
        kernel,
        out_shape=jax.ShapeDtypeStruct((m_pad, hidden), x.dtype),
        grid=(grid_m, grid_n),
        in_specs=[
            pl.BlockSpec(memory_space=pltpu.SMEM),              # seed scalar
            pl.BlockSpec((tm, hidden), lambda i, j: (i, 0)),    # x rows (reused across j)
            pl.BlockSpec((tn, hidden), lambda i, j: (j, 0)),    # W rows, bf16 (out, in)
            pl.BlockSpec((1, tn), lambda i, j: (0, j)),         # bias columns
            pl.BlockSpec((1, hidden), lambda i, j: (0, 0)),     # gamma
            pl.BlockSpec((1, hidden), lambda i, j: (0, 0)),     # beta
        ],
        out_specs=pl.BlockSpec((tm, tn), lambda i, j: (i, j)),
        compiler_params=pltpu.CompilerParams(
            dimension_semantics=("parallel", "arbitrary")),
    )(seed_arr, x2, w_bf16, b2, g2, beta2)

    return out[:m].reshape(batch, seq, hidden)


def _init_params(key, hidden):
    # Deterministic init mirroring nn.Linear / nn.LayerNorm defaults.
    kw, kb = jax.random.split(key)
    bound = 1.0 / (hidden ** 0.5)
    w = jax.random.uniform(kw, (hidden, hidden), jnp.float32, -bound, bound)
    b = jax.random.uniform(kb, (hidden,), jnp.float32, -bound, bound)
    gamma = jnp.ones((hidden,), jnp.float32)
    beta = jnp.zeros((hidden,), jnp.float32)
    return w, b, gamma, beta


def _reference_eval(x, w, b, gamma, beta, eps=1e-5):
    # Matches the kernel's numerics: f32 LayerNorm, bf16 matmul, f32 accumulate.
    mean = jnp.mean(x, axis=-1, keepdims=True)
    var = jnp.mean((x - mean) ** 2, axis=-1, keepdims=True)
    xn = (x - mean) * lax.rsqrt(var + eps) * gamma + beta
    y = jnp.dot(xn.astype(jnp.bfloat16), w.astype(jnp.bfloat16).T,
                preferred_element_type=jnp.float32) + b
    return y.astype(x.dtype)


if __name__ == "__main__":
    key = jax.random.PRNGKey(0)
    kx, kp = jax.random.split(key)

    batch, seq, hidden = 2, 8, 32
    x = jax.random.normal(kx, (batch, seq, hidden), jnp.float32)
    w, b, gamma, beta = _init_params(kp, hidden)

    # Eval mode (dropout = identity): check against a numerics-matched reference.
    y_eval = output_layer(x, w, b, gamma, beta, drop_prob=0.1, training=False)
    jax.block_until_ready(y_eval)
    ref = _reference_eval(x, w, b, gamma, beta)
    assert y_eval.shape == x.shape
    assert jnp.allclose(y_eval, ref, atol=1e-2, rtol=1e-2), "mismatch vs reference"

    # Training mode (stochastic dropout via in-kernel counter-based PRNG).
    y_train = output_layer(x, w, b, gamma, beta, drop_prob=0.1, training=True,
                           seed=42)
    jax.block_until_ready(y_train)
    assert bool(jnp.all(jnp.isfinite(y_train)))
    zero_frac = float(jnp.mean(y_train == 0.0))
    assert 0.01 < zero_frac < 0.30, f"dropout rate looks wrong: {zero_frac}"

    print("KERNEL_OK")
</pallas_src>

<mosaic_0001>
module attributes {stable_mosaic.version = 11 : i64} {
  func.func @_output_layer_kernel(%arg0: i32, %arg1: i32, %arg2: memref<1xi32, #tpu.memory_space<smem>>, %arg3: memref<16x32xf32, #tpu.memory_space<vmem>>, %arg4: memref<32x32xbf16, #tpu.memory_space<vmem>>, %arg5: memref<1x32xf32, #tpu.memory_space<vmem>>, %arg6: memref<1x32xf32, #tpu.memory_space<vmem>>, %arg7: memref<1x32xf32, #tpu.memory_space<vmem>>, %arg8: memref<16x32xf32, #tpu.memory_space<vmem>>) attributes {dimension_semantics = [#tpu.dimension_semantics<parallel>, #tpu.dimension_semantics<arbitrary>], iteration_bounds = array<i64: 1, 1>, scalar_prefetch = 0 : i64, scratch_operands = 0 : i64, tpu.core_type = #tpu.core_type<tc>, window_params = [{transform_indices = @transform_0, window_bounds = array<i64: 1>}, {transform_indices = @transform_1, window_bounds = array<i64: 16, 32>}, {transform_indices = @transform_2, window_bounds = array<i64: 32, 32>}, {transform_indices = @transform_3, window_bounds = array<i64: 1, 32>}, {pipeline_mode = #tpu.pipeline_mode<synchronous>, transform_indices = @transform_4, window_bounds = array<i64: 1, 32>}, {pipeline_mode = #tpu.pipeline_mode<synchronous>, transform_indices = @transform_5, window_bounds = array<i64: 1, 32>}, {transform_indices = @transform_6, window_bounds = array<i64: 16, 32>}]} {
    %c0 = arith.constant 0 : index
    %c0_0 = arith.constant 0 : index
    %0 = vector.load %arg3[%c0, %c0_0] : memref<16x32xf32, #tpu.memory_space<vmem>>, vector<16x32xf32>
    %cst = arith.constant dense<0.000000e+00> : vector<16xf32>
    %1 = vector.multi_reduction <add>, %0, %cst [1] : vector<16x32xf32> to vector<16xf32>
    %2 = vector.shape_cast %1 : vector<16xf32> to vector<16x1xf32>
    %cst_1 = arith.constant 3.200000e+01 : f32
    %3 = vector.broadcast %cst_1 : f32 to vector<16x1xf32>
    %4 = arith.divf %2, %3 : vector<16x1xf32>
    %5 = vector.broadcast %4 : vector<16x1xf32> to vector<16x32xf32>
    %6 = arith.subf %0, %5 : vector<16x32xf32>
    %7 = arith.mulf %6, %6 : vector<16x32xf32>
    %cst_2 = arith.constant dense<0.000000e+00> : vector<16xf32>
    %8 = vector.multi_reduction <add>, %7, %cst_2 [1] : vector<16x32xf32> to vector<16xf32>
    %9 = vector.shape_cast %8 : vector<16xf32> to vector<16x1xf32>
    %cst_3 = arith.constant 3.200000e+01 : f32
    %10 = vector.broadcast %cst_3 : f32 to vector<16x1xf32>
    %11 = arith.divf %9, %10 : vector<16x1xf32>
    %cst_4 = arith.constant 9.99999974E-6 : f32
    %12 = vector.broadcast %cst_4 : f32 to vector<16x1xf32>
    %13 = arith.addf %11, %12 : vector<16x1xf32>
    %14 = math.rsqrt %13 : vector<16x1xf32>
    %15 = vector.broadcast %14 : vector<16x1xf32> to vector<16x32xf32>
    %16 = arith.mulf %6, %15 : vector<16x32xf32>
    %c0_5 = arith.constant 0 : index
    %c0_6 = arith.constant 0 : index
    %17 = vector.load %arg6[%c0_5, %c0_6] : memref<1x32xf32, #tpu.memory_space<vmem>>, vector<1x32xf32>
    %18 = vector.broadcast %17 : vector<1x32xf32> to vector<16x32xf32>
    %19 = arith.mulf %16, %18 : vector<16x32xf32>
    %c0_7 = arith.constant 0 : index
    %c0_8 = arith.constant 0 : index
    %20 = vector.load %arg7[%c0_7, %c0_8] : memref<1x32xf32, #tpu.memory_space<vmem>>, vector<1x32xf32>
    %21 = vector.broadcast %20 : vector<1x32xf32> to vector<16x32xf32>
    %22 = arith.addf %19, %21 : vector<16x32xf32>
    %23 = arith.truncf %22 : vector<16x32xf32> to vector<16x32xbf16>
    %c0_9 = arith.constant 0 : index
    %c0_10 = arith.constant 0 : index
    %24 = vector.load %arg4[%c0_9, %c0_10] : memref<32x32xbf16, #tpu.memory_space<vmem>>, vector<32x32xbf16>
    %cst_11 = arith.constant dense<0.000000e+00> : vector<16x32xf32>
    %25 = tpu.matmul %23, %24, %cst_11 {dimension_numbers = #tpu.dot_dimension_numbers<[1], [1], [0], [0], [0, 0, 1, 0], [], []>} : vector<16x32xbf16>, vector<32x32xbf16>, vector<16x32xf32> -> vector<16x32xf32>
    %c0_12 = arith.constant 0 : index
    %c0_13 = arith.constant 0 : index
    %26 = vector.load %arg5[%c0_12, %c0_13] : memref<1x32xf32, #tpu.memory_space<vmem>>, vector<1x32xf32>
    %27 = vector.broadcast %26 : vector<1x32xf32> to vector<16x32xf32>
    %28 = arith.addf %25, %27 : vector<16x32xf32>
    %c0_14 = arith.constant 0 : index
    %c0_15 = arith.constant 0 : index
    %29 = vector.load %arg8[%c0_14, %c0_15] : memref<16x32xf32, #tpu.memory_space<vmem>>, vector<16x32xf32>
    tpu.vector_store %arg8[%c0_14, %c0_15], %28 {strides = array<i32>} : memref<16x32xf32, #tpu.memory_space<vmem>>, vector<16x32xf32>,
    return
  }
  func.func @transform_0(%arg0: i32, %arg1: i32) -> i32 {
    %c0_i32 = arith.constant 0 : i32
    %c0_i32_0 = arith.constant 0 : i32
    return %c0_i32 : i32
  }
  func.func @transform_1(%arg0: i32, %arg1: i32) -> (i32, i32) {
    %c0_i32 = arith.constant 0 : i32
    %c0_i32_0 = arith.constant 0 : i32
    return %arg0, %c0_i32 : i32, i32
  }
  func.func @transform_2(%arg0: i32, %arg1: i32) -> (i32, i32) {
    %c0_i32 = arith.constant 0 : i32
    %c0_i32_0 = arith.constant 0 : i32
    return %arg1, %c0_i32 : i32, i32
  }
  func.func @transform_3(%arg0: i32, %arg1: i32) -> (i32, i32) {
    %c0_i32 = arith.constant 0 : i32
    %c0_i32_0 = arith.constant 0 : i32
    return %c0_i32, %arg1 : i32, i32
  }
  func.func @transform_4(%arg0: i32, %arg1: i32) -> (i32, i32) {
    %c0_i32 = arith.constant 0 : i32
    %c0_i32_0 = arith.constant 0 : i32
    %c0_i32_1 = arith.constant 0 : i32
    return %c0_i32, %c0_i32_0 : i32, i32
  }
  func.func @transform_5(%arg0: i32, %arg1: i32) -> (i32, i32) {
    %c0_i32 = arith.constant 0 : i32
    %c0_i32_0 = arith.constant 0 : i32
    %c0_i32_1 = arith.constant 0 : i32
    return %c0_i32, %c0_i32_0 : i32, i32
  }
  func.func @transform_6(%arg0: i32, %arg1: i32) -> (i32, i32) {
    %c0_i32 = arith.constant 0 : i32
    return %arg0, %arg1 : i32, i32
  }
}

</mosaic_0001>

<llo_original>
// kernel: tpu_custom_call.1
$region0: #{tpu_custom_call.1}
  #allocation0 [shape = 'u32[]', space=smem, size = 0x4, offset = 0x4, fixed_abs, tag = 'smem constant byte address 0x4 - core index']
  #allocation1 [shape = 'u32[144,128]{1,0:T(1,128)}', space=vmem, size = 0x12000, scoped, tag = 'internal scratch']
  #allocation2 [shape = 's32[1]{0:T(128)S(6)}', space=smem, size = 0x200, scoped, tag = 'scoped memory for tpu_custom_call.1']
  %s0 = inlined_call_operand.<no memory space> [shape: s32[1], index: 0, kind: input, shape index: {}]
  %s1 = inlined_call_operand.hbm [shape: f32[16,32], index: 1, kind: input, shape index: {}]
  %s2 = inlined_call_operand.hbm [shape: bf16[32,32], index: 2, kind: input, shape index: {}]
  %s3 = inlined_call_operand.vmem [shape: f32[1,32], index: 3, kind: input, shape index: {}]
  %s4 = inlined_call_operand.vmem [shape: f32[1,32], index: 4, kind: input, shape index: {}]
  %s5 = inlined_call_operand.vmem [shape: f32[1,32], index: 5, kind: input, shape index: {}]
  %s6 = inlined_call_operand.hbm [shape: f32[16,32], index: 6, kind: output, shape index: {}]
  %s7 = sld [smem:[#allocation0]]
  $region42: #{tpu_custom_call.1} parent=0
    _
  %s9 = ssub.s32 1, %s7
  %s10 = scalar_select 0, %s9, %s7
  %11 = sst [smem:[#allocation2]] %s0
  $region1: #{tpu_custom_call.1} parent=0
    #allocation3 [shape = 'u8[8192]{0}', space=vmem, size = 0x2000, scoped, tag = 'input window, operand 1, single buffered']
    #allocation4 [shape = 's32[1]{0}', space=sflag, size = 0x4, scoped, tag = 'scoped memory for tpu_custom_call.1']
    #allocation5 [shape = 's32[1]{0}', space=sflag, size = 0x4, scoped, tag = 'scoped memory for tpu_custom_call.1']
    #allocation6 [shape = 'u8[8192]{0}', space=vmem, size = 0x2000, scoped, tag = 'input window, operand 2, single buffered']
    #allocation7 [shape = 's32[1]{0}', space=sflag, size = 0x4, scoped, tag = 'scoped memory for tpu_custom_call.1']
    #allocation8 [shape = 'u8[8192]{0}', space=vmem, size = 0x2000, scoped, tag = 'output window, operand 0, single buffered']
    %12 = vsyncpa [#allocation4], 0
    %13 = vsyncpa [#allocation7], 0
    %14 = vsyncpa [#allocation5], 0
    // Predicated region
    $region2: #{tpu_custom_call.1} parent=1 // pred_check
      _
    $region3: #{tpu_custom_call.1} parent=1 // pred_check_branch
      %16 = sbr.rel (0) target = $region5
    $region4: #{tpu_custom_call.1} parent=1 // pred_region
      _
    $region5: #{tpu_custom_call.1} parent=1 // pred_fallthru
      _
    // Predicated region
    $region6: #{tpu_custom_call.1} parent=1 // pred_check
      _
    $region7: #{tpu_custom_call.1} parent=1 // pred_check_branch
      %18 = sbr.rel (0) target = $region9
    $region8: #{tpu_custom_call.1} parent=1 // pred_region
      %s20 = ssub.s32 256, 256
      %21 = vsyncadd [#allocation4], %s20
      %s22 = sshll.u32 [#allocation3], 4
      %s23 = int_to_ptr.vmem [resolvable:$true] %s22
      %28 = dma.hbm_to_vmem [thread:$0]  %s1, 256, %s23, [#allocation4], 128, 128, 8
    $region9: #{tpu_custom_call.1} parent=1 // pred_fallthru
      _
    // Predicated region
    $region10: #{tpu_custom_call.1} parent=1 // pred_check
      _
    $region11: #{tpu_custom_call.1} parent=1 // pred_check_branch
      %30 = sbr.rel (0) target = $region13
    $region12: #{tpu_custom_call.1} parent=1 // pred_region
      %s32 = ssub.s32 256, 256
      %33 = vsyncadd [#allocation7], %s32
      %s34 = sshll.u32 [#allocation6], 4
      %s35 = int_to_ptr.vmem [resolvable:$true] %s34
      %40 = dma.hbm_to_vmem [thread:$0]  %s2, 256, %s35, [#allocation7], 64, 64, 4
    $region13: #{tpu_custom_call.1} parent=1 // pred_fallthru
      _
    // Predicated region
    $region14: #{tpu_custom_call.1} parent=1 // pred_check
      _
    $region15: #{tpu_custom_call.1} parent=1 // pred_check_branch
      %42 = sbr.rel (0) target = $region17
    $region16: #{tpu_custom_call.1} parent=1 // pred_region
      _
    $region17: #{tpu_custom_call.1} parent=1 // pred_fallthru
      _
    // Predicated region
    $region18: #{tpu_custom_call.1} parent=1 // pred_check
      _
    $region19: #{tpu_custom_call.1} parent=1 // pred_check_branch
      %44 = sbr.rel (0) target = $region21
    $region20: #{tpu_custom_call.1} parent=1 // pred_region
      _
    $region21: #{tpu_custom_call.1} parent=1 // pred_fallthru
      _
    // Predicated region
    $region22: #{tpu_custom_call.1} parent=1 // pred_check
      _
    $region23: #{tpu_custom_call.1} parent=1 // pred_check_branch
      %46 = sbr.rel (0) target = $region25
    $region24: #{tpu_custom_call.1} parent=1 // pred_region
      _
    $region25: #{tpu_custom_call.1} parent=1 // pred_fallthru
      _
    // Predicated region
    $region26: #{tpu_custom_call.1} parent=1 // pred_check
      _
    $region27: #{tpu_custom_call.1} parent=1 // pred_check_branch
      %48 = sbr.rel (0) target = $region29
    $region28: #{tpu_custom_call.1} parent=1 // pred_region
      %49 = dma.done [#allocation4], 256
    $region29: #{tpu_custom_call.1} parent=1 // pred_fallthru
      _
    // Predicated region
    $region30: #{tpu_custom_call.1} parent=1 // pred_check
      _
    $region31: #{tpu_custom_call.1} parent=1 // pred_check_branch
      %51 = sbr.rel (0) target = $region33
    $region32: #{tpu_custom_call.1} parent=1 // pred_region
      %52 = dma.done [#allocation7], 256
    $region33: #{tpu_custom_call.1} parent=1 // pred_fallthru
      _
    %v54 = vld [vmem:[#allocation3] sm:$0xff]
    %v55 = vld [vmem:[#allocation3 + $0x8] sm:$0xff]
    %vm56 = vcmask 261120
    %v57 = vsel %vm56, %v54, 0.0
    %58 = vadd.xlane.f32.xlu0 %v57
    %v59 = vpop.xlane.xlu0 %58
    %v60 = vsel %vm56, %v55, 0.0
    %61 = vadd.xlane.f32.xlu0 %v60
    %v62 = vpop.xlane.xlu0 %61
    %v63 = vrcp.pop 32.0
    %v64 = vmul.f32 %v59, %v63
    %v65 = vmul.f32 %v62, %v63
    %v66 = vsub.f32 %v54, %v64
    %v67 = vsub.f32 %v55, %v65
    %v68 = vmul.f32 %v66, %v66
    %v69 = vmul.f32 %v67, %v67
    %v70 = vsel %vm56, %v68, 0.0
    %71 = vadd.xlane.f32.xlu0 %v70
    %v72 = vpop.xlane.xlu0 %71
    %v73 = vsel %vm56, %v69, 0.0
    %74 = vadd.xlane.f32.xlu0 %v73
    %v75 = vpop.xlane.xlu0 %74
    %v76 = vmul.f32 %v72, %v63
    %v77 = vmul.f32 %v75, %v63
    %v78 = vadd.f32 %v76, 1e-05
    %v79 = vadd.f32 %v77, 1e-05
    %v80 = vrsqrt.pop %v78
    %v81 = vrsqrt.pop %v79
    %v82 = vmul.f32 %v66, %v80
    %v83 = vmul.f32 %v67, %v81
    %v84 = vld [vmem:[%s4] sm:$0x1]
    %v86 = vlaneseq
    %v87 = vshrl.u32 %v86, 7
    %v88 = vsub.s32 0, %v87
    %v89 = vrot.slane %v84, %v88
    %v91 = vmul.f32 %v82, %v89
    %v92 = vmul.f32 %v83, %v89
    %v93 = vld [vmem:[%s5] sm:$0x1]
    %v95 = vlaneseq
    %v96 = vshrl.u32 %v95, 7
    %v97 = vsub.s32 0, %v96
    %v98 = vrot.slane %v93, %v97
    %v100 = vadd.f32 %v91, %v98
    %v101 = vadd.f32 %v92, %v98
    %v102 = vpack.c.bf16 %v101, %v100
    %v103 = vld [vmem:[#allocation6] sm:$0xf]
    %v104 = vld [vmem:[#allocation6 + $0x4] sm:$0xf]
    %v105 = vld [vmem:[#allocation6 + $0x8] sm:$0xf]
    %v106 = vld [vmem:[#allocation6 + $0xc] sm:$0xf]
    %v107 = vld [vmem:[%s3] sm:$0x1]
    %v109 = vlaneseq
    %v110 = vshrl.u32 %v109, 7
    %v111 = vsub.s32 0, %v110
    %v112 = vrot.slane %v107, %v111
    %v118 = vunpack.c.l.b16 %v103
    %v119 = vunpack.c.l.b16 %v104
    %v120 = vunpack.c.l.b16 %v105
    %v121 = vunpack.c.l.b16 %v106
    %v122 = vpack.c.b16 %v119, %v118
    %v123 = vpack.c.b16 %v121, %v120
    %v125 = vsel %vm56, %v102, 0
    %v128 = vsel %vm56, %v122, 0
    %v131 = vsel %vm56, %v123, 0
    %133 = vmatprep.subr.bf16.mxu0 0
    %134 = vmatpush1.bf16.xpose.msra.mxu0 %v128
    %135 = vmatprep.subr.bf16.mxu0 0
    %136 = vmatpush1.bf16.xpose.msra.mxu0 %v131
    %137 = vmatprep.subr.bf16.mxu0 0
    %138 = vmatpush1.bf16.xpose.msra.mxu0 0
    %139 = vmatprep.subr.bf16.mxu0 0
    %140 = vmatpush1.bf16.xpose.msra.mxu0 0
    %141 = vmatprep.subr.bf16.mxu0 0
    %142 = vmatpush1.bf16.xpose.msra.mxu0 0
    %143 = vmatprep.subr.bf16.mxu0 0
    %144 = vmatpush1.bf16.xpose.msra.mxu0 0
    %145 = vmatprep.subr.bf16.mxu0 0
    %146 = vmatpush1.bf16.xpose.msra.mxu0 0
    %147 = vmatprep.subr.bf16.mxu0 0
    %148 = vmatpush1.bf16.xpose.msra.mxu0 0
    %149 = vmatprep.subr.bf16.mxu0 0
    %150 = vmatpush1.bf16.xpose.msra.mxu0 0
    %151 = vmatprep.subr.bf16.mxu0 0
    %152 = vmatpush1.bf16.xpose.msra.mxu0 0
    %153 = vmatprep.subr.bf16.mxu0 0
    %154 = vmatpush1.bf16.xpose.msra.mxu0 0
    %155 = vmatprep.subr.bf16.mxu0 0
    %156 = vmatpush1.bf16.xpose.msra.mxu0 0
    %157 = vmatprep.subr.bf16.mxu0 0
    %158 = vmatpush1.bf16.xpose.msra.mxu0 0
    %159 = vmatprep.subr.bf16.mxu0 0
    %160 = vmatpush1.bf16.xpose.msra.mxu0 0
    %161 = vmatprep.subr.bf16.mxu0 0
    %162 = vmatpush1.bf16.xpose.msra.mxu0 0
    %163 = vmatprep.subr.bf16.mxu0 0
    %164 = vmatpush1.bf16.xpose.msra.mxu0 0
    %165 = vmatprep.mubr.bf16.mxu0 0
    %166 = vmatmul.mubr.bf16.gmra.mrb[0].mxu0 %v125
    %v167 = vpop.f32.mrb[0].mxu0
    %v168 = vadd.f32 %v112, %v167
    %v169 = vpop.f32.mrb[0].mxu0
    %v170 = vpop.f32.mrb[0].mxu0
    %v171 = vadd.f32 %v112, %v170
    %v172 = vpop.f32.mrb[0].mxu0
    %173 = vdwg.mxu0
    %174 = vst.msk [vmem:[#allocation8] sm:$0xff] %vm56, %v168
    %175 = vst.msk [vmem:[#allocation8 + $0x8] sm:$0xff] %vm56, %v171
    // Predicated region
    $region34: #{tpu_custom_call.1} parent=1 // pred_check
      _
    $region35: #{tpu_custom_call.1} parent=1 // pred_check_branch
      %177 = sbr.rel (0) target = $region37
    $region36: #{tpu_custom_call.1} parent=1 // pred_region
      %s179 = ssub.s32 256, 256
      %180 = vsyncadd [#allocation5], %s179
      %s181 = sshll.u32 [#allocation8], 4
      %s182 = int_to_ptr.vmem [resolvable:$true] %s181
      %187 = dma.vmem_to_hbm [thread:$0]  %s182, 256, %s6, [#allocation5], 128, 128, 8
    $region37: #{tpu_custom_call.1} parent=1 // pred_fallthru
      _
    // Predicated region
    $region38: #{tpu_custom_call.1} parent=1 // pred_check
      _
    $region39: #{tpu_custom_call.1} parent=1 // pred_check_branch
      %189 = sbr.rel (0) target = $region41
    $region40: #{tpu_custom_call.1} parent=1 // pred_region
      %190 = dma.done [#allocation5], 256
    $region41: #{tpu_custom_call.1} parent=1 // pred_fallthru
      _
    %191 = vsyncpa [#allocation4], 1
    %192 = vsyncpa [#allocation7], 1
    %193 = vsyncpa [#allocation5], 1

</llo_original>
